<compile_context>
chip_gen: v6e
topology: v6e:2x2x1
jax: 0.10.0
libtpu: 0.0.40
codegen_flags: <defaults>
</compile_context>

<pallas_src>
import jax
import jax.numpy as jnp
from jax.experimental import pallas as pl
from jax.experimental.pallas import tpu as pltpu

LANES = 512                       # lane width of the flat view (multiple of 128)
_SAMPLES_PER_ROW = LANES // 2     # 2 features per sample
_TARGET_TILE_BYTES = 2 * 1024 * 1024


def _gaussian_membership_kernel(c_ref, k_ref, x_ref, o_ref):
    # c_ref, k_ref : (2,) SMEM scalars  (centers; coefficients -0.5/sigma^2)
    # x_ref, o_ref : (br, LANES) VMEM tiles of the flattened (B, 2) buffer.
    lanes = x_ref.shape[-1]
    # Flat element (row*lanes + l) belongs to feature (l % 2) because lanes is even.
    lane_idx = jax.lax.broadcasted_iota(jnp.int32, (1, lanes), 1)
    odd = (lane_idx & 1) == 1
    c = jnp.where(odd, c_ref[1], c_ref[0])      # (1, lanes), broadcasts over sublanes
    k = jnp.where(odd, k_ref[1], k_ref[0])
    d = x_ref[...].astype(jnp.float32) - c
    o_ref[...] = jnp.exp(k * (d * d)).astype(o_ref.dtype)


def _bulk_pallas(x2d, c32, coef, out_dtype):
    """Run the kernel over a dense (rows, LANES) view of the flattened samples."""
    rows, lanes = x2d.shape
    itemsize = jnp.dtype(out_dtype).itemsize
    mult = 16 if itemsize == 2 else 8                      # sublane multiple per dtype
    target_rows = max(mult, _TARGET_TILE_BYTES // (lanes * itemsize))

    if rows <= mult:
        br = rows                                          # full-extent block (allowed)
    else:
        # Aim for an even number of grid steps (megacore balance on v7x) while
        # keeping each tile <= ~2 MiB.
        pairs = -(-rows // (2 * target_rows))              # cdiv
        br = -(-rows // (2 * pairs))                       # cdiv
        br = -(-br // mult) * mult                         # round up to sublane multiple
        br = min(br, (rows // mult) * mult)                # keep block <= array extent
    grid = pl.cdiv(rows, br)                               # last block may be partial

    n = rows * lanes
    return pl.pallas_call(
        _gaussian_membership_kernel,
        out_shape=jax.ShapeDtypeStruct((rows, lanes), out_dtype),
        grid_spec=pltpu.PrefetchScalarGridSpec(
            num_scalar_prefetch=2,                         # c, coef -> SMEM scalars
            grid=(grid,),
            in_specs=[pl.BlockSpec((br, lanes), lambda i, c_r, k_r: (i, 0))],
            out_specs=pl.BlockSpec((br, lanes), lambda i, c_r, k_r: (i, 0)),
        ),
        compiler_params=pltpu.CompilerParams(
            dimension_semantics=("parallel",),
        ),
        cost_estimate=pl.CostEstimate(
            flops=3 * n,                  # sub + 2 muls per element
            transcendentals=n,            # one exp per element
            bytes_accessed=2 * n * itemsize + 16,
        ),
    )(c32, coef, x2d)


def gaussian_membership(x, c, sigma):
    """x: (B, 2); c, sigma: (2,). Returns exp(-0.5*(x-c)^2/sigma^2), shape (B, 2)."""
    B, F = x.shape
    assert F == 2, "GaussianMembership expects 2 membership functions"

    # Keep bf16 I/O in bf16 (halves HBM traffic); everything else computes/stores f32.
    out_dtype = jnp.bfloat16 if x.dtype == jnp.bfloat16 else jnp.float32
    x = x.astype(out_dtype)

    c32 = c.astype(jnp.float32)
    sigma32 = sigma.astype(jnp.float32)
    coef = -0.5 / (sigma32 * sigma32)        # precompute: no per-element divide

    # Bulk = largest prefix that is a whole number of 512-element rows (zero-copy
    # reshape when B % 256 == 0).  The remaining tail (< 256 samples) is so small
    # that plain JAX is the right call (avoids full-array pad + slice HBM passes).
    b_bulk = (B // _SAMPLES_PER_ROW) * _SAMPLES_PER_ROW
    pieces = []
    if b_bulk:
        rows = (b_bulk * 2) // LANES
        x_bulk = x if b_bulk == B else x[:b_bulk]
        out2d = _bulk_pallas(x_bulk.reshape(rows, LANES), c32, coef, out_dtype)
        pieces.append(out2d.reshape(b_bulk, 2))
    if b_bulk != B:
        x_tail = x[b_bulk:].astype(jnp.float32)
        pieces.append(jnp.exp(coef * (x_tail - c32) ** 2).astype(out_dtype))
    return pieces[0] if len(pieces) == 1 else jnp.concatenate(pieces, axis=0)


if __name__ == "__main__":
    key = jax.random.PRNGKey(0)
    kx, kc, ks = jax.random.split(key, 3)

    # Deterministic parameter init mirroring the module's __init__:
    #   c ~ randn(2);  sigma = |randn(2)| + 0.1
    c = jax.random.normal(kc, (2,), dtype=jnp.float32)
    sigma = jnp.abs(jax.random.normal(ks, (2,), dtype=jnp.float32)) + 0.1

    def reference(xx):
        return jnp.exp(-0.5 * (xx.astype(jnp.float32) - c) ** 2 / sigma ** 2)

    # 1) Aligned batch -> fully zero-copy view, multi-step grid (megacore-friendly).
    B = 4096
    x = jax.random.normal(kx, (B, 2), dtype=jnp.float32)
    out = jax.block_until_ready(gaussian_membership(x, c, sigma))
    assert out.shape == (B, 2) and out.dtype == jnp.float32
    assert jnp.allclose(out, reference(x), rtol=1e-5, atol=1e-5), "mismatch (aligned)"

    # 2) Row count not a multiple of the block rows -> partial last block (masked writes).
    x2 = jax.random.normal(kx, (2304, 2), dtype=jnp.float32)
    out2 = jax.block_until_ready(gaussian_membership(x2, c, sigma))
    assert jnp.allclose(out2, reference(x2), rtol=1e-5, atol=1e-5), "mismatch (partial)"

    # 3) Ragged batch -> kernel bulk + tiny plain-JAX tail, no pad/slice passes.
    x3 = jax.random.normal(kx, (1000, 2), dtype=jnp.float32)
    out3 = jax.block_until_ready(gaussian_membership(x3, c, sigma))
    assert out3.shape == (1000, 2)
    assert jnp.allclose(out3, reference(x3), rtol=1e-5, atol=1e-5), "mismatch (ragged)"

    # 4) bf16 I/O stays bf16 in HBM; compute is f32 in-kernel.
    xb = x.astype(jnp.bfloat16)
    outb = jax.block_until_ready(gaussian_membership(xb, c, sigma))
    assert outb.dtype == jnp.bfloat16
    assert jnp.allclose(outb.astype(jnp.float32), reference(xb), rtol=2e-2, atol=2e-2), \
        "mismatch (bf16)"

    print("KERNEL_OK")
</pallas_src>

<mosaic_0001>
module attributes {stable_mosaic.version = 11 : i64} {
  func.func @_gaussian_membership_kernel(%arg0: i32, %arg1: memref<2xf32, #tpu.memory_space<smem>>, %arg2: memref<2xf32, #tpu.memory_space<smem>>, %arg3: memref<8x512xf32, #tpu.memory_space<vmem>>, %arg4: memref<8x512xf32, #tpu.memory_space<vmem>>) attributes {dimension_semantics = [#tpu.dimension_semantics<parallel>], iteration_bounds = array<i64: 2>, scalar_prefetch = 2 : i64, scratch_operands = 0 : i64, tpu.core_type = #tpu.core_type<tc>, window_params = [{transform_indices = @transform_0, window_bounds = array<i64: 8, 512>}, {transform_indices = @transform_1, window_bounds = array<i64: 8, 512>}]} {
    %0 = tpu.iota {dimensions = array<i32: 1>} : vector<1x512xi32>
    %c1_i32 = arith.constant 1 : i32
    %1 = vector.broadcast %c1_i32 : i32 to vector<1x512xi32>
    %2 = arith.andi %0, %1 : vector<1x512xi32>
    %c1_i32_0 = arith.constant 1 : i32
    %3 = vector.broadcast %c1_i32_0 : i32 to vector<1x512xi32>
    %4 = arith.cmpi eq, %2, %3 : vector<1x512xi32>
    %c1 = arith.constant 1 : index
    %5 = memref.load %arg1[%c1] : memref<2xf32, #tpu.memory_space<smem>>
    %c0 = arith.constant 0 : index
    %6 = memref.load %arg1[%c0] : memref<2xf32, #tpu.memory_space<smem>>
    %7 = vector.broadcast %5 : f32 to vector<1x512xf32>
    %8 = vector.broadcast %6 : f32 to vector<1x512xf32>
    %9 = arith.select %4, %7, %8 : vector<1x512xi1>, vector<1x512xf32>
    %c1_1 = arith.constant 1 : index
    %10 = memref.load %arg2[%c1_1] : memref<2xf32, #tpu.memory_space<smem>>
    %c0_2 = arith.constant 0 : index
    %11 = memref.load %arg2[%c0_2] : memref<2xf32, #tpu.memory_space<smem>>
    %12 = vector.broadcast %10 : f32 to vector<1x512xf32>
    %13 = vector.broadcast %11 : f32 to vector<1x512xf32>
    %14 = arith.select %4, %12, %13 : vector<1x512xi1>, vector<1x512xf32>
    %c0_3 = arith.constant 0 : index
    %c0_4 = arith.constant 0 : index
    %15 = vector.load %arg3[%c0_3, %c0_4] : memref<8x512xf32, #tpu.memory_space<vmem>>, vector<8x512xf32>
    %16 = vector.broadcast %9 : vector<1x512xf32> to vector<8x512xf32>
    %17 = arith.subf %15, %16 : vector<8x512xf32>
    %18 = arith.mulf %17, %17 : vector<8x512xf32>
    %19 = vector.broadcast %14 : vector<1x512xf32> to vector<8x512xf32>
    %20 = arith.mulf %19, %18 : vector<8x512xf32>
    %21 = math.exp %20 : vector<8x512xf32>
    %c0_5 = arith.constant 0 : index
    %c0_6 = arith.constant 0 : index
    %22 = vector.load %arg4[%c0_5, %c0_6] : memref<8x512xf32, #tpu.memory_space<vmem>>, vector<8x512xf32>
    tpu.vector_store %arg4[%c0_5, %c0_6], %21 {strides = array<i32>} : memref<8x512xf32, #tpu.memory_space<vmem>>, vector<8x512xf32>,
    return
  }
  func.func @transform_0(%arg0: i32, %arg1: memref<2xf32, #tpu.memory_space<smem>>, %arg2: memref<2xf32, #tpu.memory_space<smem>>) -> (i32, i32) {
    %c0_i32 = arith.constant 0 : i32
    %c0_i32_0 = arith.constant 0 : i32
    return %arg0, %c0_i32 : i32, i32
  }
  func.func @transform_1(%arg0: i32, %arg1: memref<2xf32, #tpu.memory_space<smem>>, %arg2: memref<2xf32, #tpu.memory_space<smem>>) -> (i32, i32) {
    %c0_i32 = arith.constant 0 : i32
    %c0_i32_0 = arith.constant 0 : i32
    return %arg0, %c0_i32 : i32, i32
  }
}

</mosaic_0001>

<llo_original>
// kernel: tpu_custom_call.1
$region0: #{tpu_custom_call.1}
  #allocation0 [shape = 'u32[]', space=smem, size = 0x4, offset = 0x4, fixed_abs, tag = 'smem constant byte address 0x4 - core index']
  #allocation1 [shape = 'u32[144,128]{1,0:T(1,128)}', space=vmem, size = 0x12000, scoped, tag = 'internal scratch']
  #allocation2 [shape = 's32[1]{0}', space=sflag, size = 0x4, scoped, tag = 'scoped memory for tpu_custom_call.1']
  #allocation3 [shape = 'u8[512]{0}', space=smem, size = 0x200, scoped, tag = 'prefetched SMEM operand 0']
  #allocation4 [shape = 'u8[512]{0}', space=smem, size = 0x200, scoped, tag = 'prefetched SMEM operand 1']
  %s0 = inlined_call_operand.hbm [shape: f32[2], index: 0, kind: input, shape index: {}]
  %s1 = inlined_call_operand.vmem [shape: f32[2], index: 1, kind: input, shape index: {}]
  %s2 = inlined_call_operand.hbm [shape: f32[16,512], index: 2, kind: input, shape index: {}]
  %s3 = inlined_call_operand.hbm [shape: f32[16,512], index: 3, kind: output, shape index: {}]
  %s4 = sld [smem:[#allocation0]]
  $region41: #{tpu_custom_call.1} parent=0
    _
  %s6 = ssub.s32 1, %s4
  %s7 = scalar_select 0, %s6, %s4
  %9 = dma.hbm_to_smem %s0, 16, [#allocation3], [#allocation2]
  %s10 = sshll.u32 %s1, 4
  %s11 = int_to_ptr.vmem [resolvable:$true] %s10
  %13 = dma.vmem_to_smem %s11, 16, [#allocation4], [#allocation2]
  %14 = dma.done [#allocation2], 32
  %15 = sfence
  $region1: #{tpu_custom_call.1} parent=0
    #allocation5 [shape = 'u8[32768]{0}', space=vmem, size = 0x8000, scoped, tag = 'input window, operand 2']
    #allocation6 [shape = 's32[2]{0}', space=sflag, size = 0x8, scoped, tag = 'scoped memory for tpu_custom_call.1']
    #allocation7 [shape = 's32[2]{0}', space=sflag, size = 0x8, scoped, tag = 'scoped memory for tpu_custom_call.1']
    #allocation8 [shape = 'u8[32768]{0}', space=vmem, size = 0x8000, scoped, tag = 'output window, operand 0']
    %16 = vsyncpa [#allocation6], 0
    %s17 = scalar_lea.sflag [#allocation6], 1
    %18 = vsyncpa %s17, 0
    %19 = vsyncpa [#allocation7], 0
    %s20 = scalar_lea.sflag [#allocation7], 1
    %21 = vsyncpa %s20, 0
    loop: start=0, step=1, limit=4
    $region2: #{tpu_custom_call.1} parent=1 // loop_pre_header
      _
    $region3: #{tpu_custom_call.1} parent=1 // loop_header
      %s23 = sphi 0, %s27
      %p24 = scmp.ge.s32.totalorder %s23, 4
      %s33 = sphi 0, %s35
      %s36 = sphi 0, %s33
      %s37 = sphi 0, %s36
      %s53 = sphi 0, %s37
      %s59 = sphi 0, %s61
      %s62 = sphi 0, %s59
      %s63 = sphi 0, %s62
      %s79 = sphi 0, %s63
    $region4: #{tpu_custom_call.1} parent=1 // loop_header_branch
      %26 = sbr.rel (%p24) target = $region8
    $region5: #{tpu_custom_call.1} parent=1 // loop_body
      %s28 = ssub.s32 %s23, 1
      %s29 = ssub.s32 %s23, 2
      %s30 = sadd.s32 %s23, 1
      %s31 = ssub.s32 %s23, %s30
      %p32 = scmp.eq.s32.totalorder %s31, 0
      %s34 = sadd.s32 %s33, 1
      %s35 = scalar_select %p32, %s33, %s34
      %p38 = pneg %p32
      %p39 = scmp.eq.s32.totalorder %s23, 1
      %p40 = por %p38, %p39
      %p41 = scmp.ne.s32.totalorder %s33, %s36
      %p42 = scmp.eq.s32.totalorder %s23, 0
      %p43 = por %p41, %p42
      %p44 = scmp.ne.s32.totalorder %s33, %s36
      %p45 = scmp.eq.s32.totalorder %s28, 1
      %p46 = por %p44, %p45
      %p47 = scmp.ne.s32.totalorder %s36, %s37
      %p48 = scmp.eq.s32.totalorder %s28, 0
      %p49 = por %p47, %p48
      %p50 = scmp.ne.s32.totalorder %s36, %s37
      %p51 = scmp.eq.s32.totalorder %s29, 1
      %p52 = por %p50, %p51
      %p54 = scmp.ne.s32.totalorder %s37, %s53
      %p55 = scmp.eq.s32.totalorder %s29, 0
      %p56 = por %p54, %p55
      %s57 = ssub.s32 %s23, %s30
      %p58 = scmp.eq.s32.totalorder %s57, 0
      %s60 = sadd.s32 %s59, 1
      %s61 = scalar_select %p58, %s59, %s60
      %p64 = pneg %p58
      %p65 = scmp.eq.s32.totalorder %s23, 1
      %p66 = por %p64, %p65
      %p67 = scmp.ne.s32.totalorder %s59, %s62
      %p68 = scmp.eq.s32.totalorder %s23, 0
      %p69 = por %p67, %p68
      %p70 = scmp.ne.s32.totalorder %s59, %s62
      %p71 = scmp.eq.s32.totalorder %s28, 1
      %p72 = por %p70, %p71
      %p73 = scmp.ne.s32.totalorder %s62, %s63
      %p74 = scmp.eq.s32.totalorder %s28, 0
      %p75 = por %p73, %p74
      %p76 = scmp.ne.s32.totalorder %s62, %s63
      %p77 = scmp.eq.s32.totalorder %s29, 1
      %p78 = por %p76, %p77
      %p80 = scmp.ne.s32.totalorder %s63, %s79
      %p81 = scmp.eq.s32.totalorder %s29, 0
      %p82 = por %p80, %p81
      %p83 = scmp.le.s32.totalorder 1, %s23
      %p84 = scmp.lt.s32.totalorder %s23, 3
      %p85 = pnand %p83, %p84
      %p86 = pneg %p85
      // Predicated region
      $region9: #{tpu_custom_call.1} parent=5 // pred_check
        _
      $region10: #{tpu_custom_call.1} parent=5 // pred_check_branch
        %88 = sbr.rel (%p85) target = $region12
      $region11: #{tpu_custom_call.1} parent=5 // pred_region
        %s89 = ssub.s32 %s23, 1
      $region12: #{tpu_custom_call.1} parent=5 // pred_fallthru
        _
      %p90 = scmp.lt.s32.totalorder %s23, 2
      // Predicated region
      $region13: #{tpu_custom_call.1} parent=5 // pred_check
        %p91 = pneg %p90
      $region14: #{tpu_custom_call.1} parent=5 // pred_check_branch
        %93 = sbr.rel (%p91) target = $region16
      $region15: #{tpu_custom_call.1} parent=5 // pred_region
        // Predicated region
        $region17: #{tpu_custom_call.1} parent=15 // pred_check
          %p94 = pneg %p43
        $region18: #{tpu_custom_call.1} parent=15 // pred_check_branch
          %96 = sbr.rel (%p94) target = $region20
        $region19: #{tpu_custom_call.1} parent=15 // pred_region
          %s97 = sand.u32 %s33, 1
          %s98 = scalar_lea.sflag [#allocation6], %s97
          %s99 = sand.u32 %s33, 1
          %s100 = smul.addr %s99, 32
          %s101 = scalar_lea.vmem [#allocation5], %s100
          %s103 = ssub.s32 512, 512
          %104 = vsyncadd %s98, %s103
          %s105 = smul.addr %s23, 4
          %s106 = smul.addr %s105, 128
          %s107 = scalar_lea.hbm %s2, %s106
          %s109 = sshll.u32 %s101, 4
          %s110 = int_to_ptr.vmem [resolvable:$true] %s109
          %112 = dma.hbm_to_vmem [thread:$0]  %s107, 512, %s110, %s98
        $region20: #{tpu_custom_call.1} parent=15 // pred_fallthru
          _
      $region16: #{tpu_custom_call.1} parent=5 // pred_fallthru
        _
      %p113 = scmp.le.s32.totalorder 1, %s23
      %p114 = scmp.lt.s32.totalorder %s23, 3
      %p115 = pnand %p113, %p114
      %p116 = pneg %p115
      // Predicated region
      $region21: #{tpu_custom_call.1} parent=5 // pred_check
        _
      $region22: #{tpu_custom_call.1} parent=5 // pred_check_branch
        %118 = sbr.rel (%p115) target = $region24
      $region23: #{tpu_custom_call.1} parent=5 // pred_region
        %s119 = ssub.s32 %s23, 1
        %s120 = sand.u32 %s36, 1
        %s121 = scalar_lea.sflag [#allocation6], %s120
        %s122 = sand.u32 %s36, 1
        %s123 = smul.addr %s122, 32
        %s124 = scalar_lea.vmem [#allocation5], %s123
        // Predicated region
        $region25: #{tpu_custom_call.1} parent=23 // pred_check
          %p125 = pneg %p49
        $region26: #{tpu_custom_call.1} parent=23 // pred_check_branch
          %127 = sbr.rel (%p125) target = $region28
        $region27: #{tpu_custom_call.1} parent=23 // pred_region
          %128 = dma.done %s121, 512
        $region28: #{tpu_custom_call.1} parent=23 // pred_fallthru
          _
        %s129 = sand.u32 %s36, 1
        %s130 = scalar_lea.sflag [#allocation6], %s129
        %s131 = sand.u32 %s36, 1
        %s132 = smul.addr %s131, 32
        %s133 = scalar_lea.vmem [#allocation5], %s132
        %p134 = pneg %p49
        %p135 = pneg %p46
        %p136 = pneg %p75
        %p137 = pneg %p72
        %s138 = sand.u32 %s62, 1
        %s139 = scalar_lea.sflag [#allocation7], %s138
        %s140 = sand.u32 %s62, 1
        %s141 = smul.addr %s140, 32
        %s142 = scalar_lea.vmem [#allocation8], %s141
        %v143 = vlaneseq
        %v144 = vand.u32 %v143, 127
        %v145 = vadd.s32 %v144, 128
        %v146 = vadd.s32 %v144, 256
        %v147 = vadd.s32 %v144, 384
        %v148 = vand.u32 %v144, 1
        %v149 = vand.u32 %v145, 1
        %v150 = vand.u32 %v146, 1
        %v151 = vand.u32 %v147, 1
        %vm152 = vcmp.eq.s32.totalorder %v148, 1
        %vm153 = vcmp.eq.s32.totalorder %v149, 1
        %vm154 = vcmp.eq.s32.totalorder %v150, 1
        %vm155 = vcmp.eq.s32.totalorder %v151, 1
        %s156 = sld [smem:[#allocation3 + $0x1]]
        %s157 = sld [smem:[#allocation3]]
        %v158 = vstv %s156
        %v159 = vstv %s157
        %v160 = vsel %vm152, %v158, %v159
        %v161 = vsel %vm153, %v158, %v159
        %v162 = vsel %vm154, %v158, %v159
        %v163 = vsel %vm155, %v158, %v159
        %s164 = sld [smem:[#allocation4 + $0x1]]
        %s165 = sld [smem:[#allocation4]]
        %v166 = vstv %s164
        %v167 = vstv %s165
        %v168 = vsel %vm152, %v166, %v167
        %v169 = vsel %vm153, %v166, %v167
        %v170 = vsel %vm154, %v166, %v167
        %v171 = vsel %vm155, %v166, %v167
        %v172 = vld [vmem:[%s124] sm:$0xff]
        %v173 = vld [vmem:[%s124 + $0x8] sm:$0xff]
        %v174 = vld [vmem:[%s124 + $0x10] sm:$0xff]
        %v175 = vld [vmem:[%s124 + $0x18] sm:$0xff]
        %v176 = vsub.f32 %v172, %v160
        %v177 = vsub.f32 %v173, %v161
        %v178 = vsub.f32 %v174, %v162
        %v179 = vsub.f32 %v175, %v163
        %v180 = vmul.f32 %v176, %v176
        %v181 = vmul.f32 %v177, %v177
        %v182 = vmul.f32 %v178, %v178
        %v183 = vmul.f32 %v179, %v179
        %v184 = vmul.f32 %v168, %v180
        %v185 = vmul.f32 %v169, %v181
        %v186 = vmul.f32 %v170, %v182
        %v187 = vmul.f32 %v171, %v183
        %v188 = vmul.f32 %v184, 1.442695
        %v189 = vpow.pop %v188
        %v190 = vmul.f32 %v185, 1.442695
        %v191 = vpow.pop %v190
        %v192 = vmul.f32 %v186, 1.442695
        %v193 = vpow.pop %v192
        %v194 = vmul.f32 %v187, 1.442695
        %v195 = vpow.pop %v194
        %196 = vst [vmem:[%s142] sm:$0xff] %v189
        %197 = vst [vmem:[%s142 + $0x8] sm:$0xff] %v191
        %198 = vst [vmem:[%s142 + $0x10] sm:$0xff] %v193
        %199 = vst [vmem:[%s142 + $0x18] sm:$0xff] %v195
        %s200 = sand.u32 %s62, 1
        %s201 = scalar_lea.sflag [#allocation7], %s200
        %s202 = sand.u32 %s62, 1
        %s203 = smul.addr %s202, 32
        %s204 = scalar_lea.vmem [#allocation8], %s203
        // Predicated region
        $region29: #{tpu_custom_call.1} parent=23 // pred_check
          %p205 = pneg %p72
        $region30: #{tpu_custom_call.1} parent=23 // pred_check_branch
          %207 = sbr.rel (%p205) target = $region32
        $region31: #{tpu_custom_call.1} parent=23 // pred_region
          %s209 = ssub.s32 512, 512
          %210 = vsyncadd %s201, %s209
          %s211 = smul.addr %s28, 4
          %s212 = smul.addr %s211, 128
          %s213 = scalar_lea.hbm %s3, %s212
          %s215 = sshll.u32 %s204, 4
          %s216 = int_to_ptr.vmem [resolvable:$true] %s215
          %218 = dma.vmem_to_hbm [thread:$0]  %s216, 512, %s213, %s201
        $region32: #{tpu_custom_call.1} parent=23 // pred_fallthru
          _
      $region24: #{tpu_custom_call.1} parent=5 // pred_fallthru
        _
      %p219 = scmp.le.s32.totalorder 2, %s23
      // Predicated region
      $region33: #{tpu_custom_call.1} parent=5 // pred_check
        %p220 = pneg %p219
      $region34: #{tpu_custom_call.1} parent=5 // pred_check_branch
        %222 = sbr.rel (%p220) target = $region36
      $region35: #{tpu_custom_call.1} parent=5 // pred_region
        %s223 = ssub.s32 %s23, 2
        // Predicated region
        $region37: #{tpu_custom_call.1} parent=35 // pred_check
          %p224 = pneg %p78
        $region38: #{tpu_custom_call.1} parent=35 // pred_check_branch
          %226 = sbr.rel (%p224) target = $region40
        $region39: #{tpu_custom_call.1} parent=35 // pred_region
          %s227 = sand.u32 %s63, 1
          %s228 = scalar_lea.sflag [#allocation7], %s227
          %s229 = sand.u32 %s63, 1
          %s230 = smul.addr %s229, 32
          %s231 = scalar_lea.vmem [#allocation8], %s230
          %232 = dma.done %s228, 512
        $region40: #{tpu_custom_call.1} parent=35 // pred_fallthru
          _
      $region36: #{tpu_custom_call.1} parent=5 // pred_fallthru
        _
    $region6: #{tpu_custom_call.1} parent=1 // loop_footer
      %s27 = sadd.s32 1, %s23
    $region7: #{tpu_custom_call.1} parent=1 // loop_footer_branch
      %22 = sbr.rel target = $region3
    $region8: #{tpu_custom_call.1} parent=1 // loop_exit
      _
    %233 = vsyncpa [#allocation6], 1
    %s234 = scalar_lea.sflag [#allocation6], 1
    %235 = vsyncpa %s234, 1
    %236 = vsyncpa [#allocation7], 1
    %s237 = scalar_lea.sflag [#allocation7], 1
    %238 = vsyncpa %s237, 1

</llo_original>
